<compile_context>
chip_gen: v6e
topology: v6e:2x2x1
jax: 0.10.0
libtpu: 0.0.40
codegen_flags: <defaults>
</compile_context>

<pallas_src>
import jax
import jax.numpy as jnp
from jax import lax
from jax.experimental import pallas as pl
from jax.experimental.pallas import tpu as pltpu


def _subpixel_matmul_kernel(p_ref, w_ref, b_ref, o_ref):
    """One M-tile: (C2, Kdim) @ (Kdim, TM) + bias -> lane-dense (C2, TM) slab.

    p_ref: (Kdim, TM)   im2col patch slab tile (Kdim = D*D*Cin, TM spatial)
    w_ref: (C2, Kdim)   sub-pixel packed weight, C2 = S*S*Cout
    b_ref: (C2, 1)      packed bias (bias tiled S*S times)
    o_ref: (C2, TM)     lane-dense output slab tile
    """
    acc = jnp.dot(w_ref[...], p_ref[...], preferred_element_type=jnp.float32)
    o_ref[...] = (acc + b_ref[...].astype(jnp.float32)).astype(o_ref.dtype)


def resize_conv2d(x_nchw, weight, bias, *, kernel_size, scale_factor):
    """Forward pass of ResizeConv2d.

    x_nchw : (N, Cin, H, W)       float32, NCHW (PyTorch convention)
    weight : (Cin, Cout, K, K)    PyTorch ConvTranspose2d weight layout
    bias   : (Cout,)
    returns: (N, Cout, Ho, Wo)    NCHW
    """
    S = scale_factor
    P = 1
    OP = 0 if S == 1 else 1
    K = kernel_size

    N, Cin, H, W = x_nchw.shape
    Cout = weight.shape[1]
    Ho = (H - 1) * S - 2 * P + K + OP
    Wo = (W - 1) * S - 2 * P + K + OP
    assert Ho % S == 0 and Wo % S == 0, (
        "sub-pixel decomposition assumes Ho, Wo divisible by scale_factor "
        "(true for the module's kernel_size=3 configuration)")
    Hm, Wm = Ho // S, Wo // S
    C2 = S * S * Cout

    # Offset range of the equivalent stride-1 conv:
    #   out[m*S+ph] gets x[m+d] * W[..., p] with p = ph + P - d*S.
    d_min = -((K - 1 - P) // S)          # ceil((P - K + 1) / S)
    d_max = (S - 1 + P) // S             # floor((S - 1 + P) / S)
    D = d_max - d_min + 1
    DD = D * D
    Kdim = Cin * DD

    # --- Pack transposed-conv weight into sub-pixel GEMM form (C2, Kdim).
    #     Tiny static param-side loop; in a real model this is hoisted. ---
    Wp = jnp.zeros((S, S, Cout, Cin, D, D), weight.dtype)
    for th in range(D):
        for tw in range(D):
            for ph in range(S):
                for pw in range(S):
                    p = ph + P - (th + d_min) * S
                    q = pw + P - (tw + d_min) * S
                    if 0 <= p < K and 0 <= q < K:
                        Wp = Wp.at[ph, pw, :, :, th, tw].set(weight[:, :, p, q].T)
    # row: (ph*S+pw)*Cout + co ;  col: ci*DD + th*D + tw
    Wp = Wp.reshape(C2, Kdim)
    b_packed = jnp.tile(bias, S * S).reshape(C2, 1)

    # --- Pad the original input (NCHW) to cover the offset window; no zero
    #     dilation is ever materialized.  lax.pad handles negative edges. ---
    lo = -d_min
    hi_h = (Hm - 1 + d_max) - (H - 1)
    hi_w = (Wm - 1 + d_max) - (W - 1)
    x_pad = lax.pad(x_nchw, jnp.zeros((), x_nchw.dtype),
                    ((0, 0, 0), (0, 0, 0), (lo, hi_h, 0), (lo, hi_w, 0)))
    assert x_pad.shape[2] == Hm + D - 1 and x_pad.shape[3] == Wm + D - 1

    # --- Wrapper-side im2col: lane-dense (Kdim, N*Hm*Wm) slab, batch folded
    #     into the GEMM M dimension. ---
    M_total = N * Hm * Wm
    views = [x_pad[:, :, th:th + Hm, tw:tw + Wm]          # (N, Cin, Hm, Wm)
             for th in range(D) for tw in range(D)]
    patch = jnp.stack(views, axis=2)                      # (N, Cin, DD, Hm, Wm)
    patch = patch.transpose(1, 2, 0, 3, 4).reshape(Kdim, M_total)

    # --- Choose an M tile: multiple of 128 dividing M_total, with >= 2 grid
    #     steps when possible (v7x megacore); otherwise one full-M block. ---
    TM = M_total
    for cand in (2048, 1024, 512, 256, 128):
        if M_total % cand == 0 and M_total // cand >= 2:
            TM = cand
            break
    grid = (M_total // TM,)

    flops = 2 * C2 * Kdim * M_total
    bytes_accessed = 4 * (patch.size + Wp.size + b_packed.size + C2 * M_total)

    z = pl.pallas_call(
        _subpixel_matmul_kernel,
        out_shape=jax.ShapeDtypeStruct((C2, M_total), x_nchw.dtype),
        grid_spec=pltpu.PrefetchScalarGridSpec(
            num_scalar_prefetch=0,
            grid=grid,
            in_specs=[
                pl.BlockSpec((Kdim, TM), lambda m: (0, m)),
                pl.BlockSpec((C2, Kdim), lambda m: (0, 0)),
                pl.BlockSpec((C2, 1), lambda m: (0, 0)),
            ],
            out_specs=pl.BlockSpec((C2, TM), lambda m: (0, m)),
        ),
        compiler_params=pltpu.CompilerParams(
            dimension_semantics=("parallel",),
        ),
        cost_estimate=pl.CostEstimate(
            flops=int(flops), transcendentals=0,
            bytes_accessed=int(bytes_accessed)),
    )(patch, Wp, b_packed)

    # --- Pixel shuffle + layout back to NCHW, fused into ONE transpose. ---
    z6 = z.reshape(S, S, Cout, N, Hm, Wm)                 # (ph, pw, co, n, mh, mw)
    out = jnp.transpose(z6, (3, 2, 4, 0, 5, 1))           # (n, co, mh, ph, mw, pw)
    return out.reshape(N, Cout, Ho, Wo)


def _reference(x_nchw, weight, bias, *, kernel_size, scale_factor):
    """Pure-JAX reference transposed conv (lax.conv_general_dilated)."""
    stride = scale_factor
    padding = 1
    output_padding = 0 if scale_factor == 1 else 1
    K = kernel_size
    w_flip = jnp.transpose(jnp.flip(weight, (2, 3)), (1, 0, 2, 3))   # OIHW
    lo = K - 1 - padding
    hi = K - 1 - padding + output_padding
    out = lax.conv_general_dilated(
        x_nchw, w_flip,
        window_strides=(1, 1),
        padding=((lo, hi), (lo, hi)),
        lhs_dilation=(stride, stride),
        dimension_numbers=("NCHW", "OIHW", "NCHW"),
    )
    return out + bias[None, :, None, None]


if __name__ == "__main__":
    # Module config: ResizeConv2d(in_channels=4, out_channels=8,
    #                             kernel_size=3, scale_factor=2)
    in_channels, out_channels, kernel_size, scale_factor = 4, 8, 3, 2
    N, H, W = 2, 16, 16

    key = jax.random.PRNGKey(0)
    kx, kw, kb = jax.random.split(key, 3)
    x = jax.random.normal(kx, (N, in_channels, H, W), dtype=jnp.float32)
    fan = in_channels * kernel_size * kernel_size
    weight = jax.random.uniform(
        kw, (in_channels, out_channels, kernel_size, kernel_size),
        minval=-1.0 / jnp.sqrt(fan), maxval=1.0 / jnp.sqrt(fan),
        dtype=jnp.float32)
    bias = jax.random.uniform(
        kb, (out_channels,),
        minval=-1.0 / jnp.sqrt(fan), maxval=1.0 / jnp.sqrt(fan),
        dtype=jnp.float32)

    # scale_factor != 1 branch (stride-2 transposed conv, output_padding=1).
    out = resize_conv2d(x, weight, bias,
                        kernel_size=kernel_size, scale_factor=scale_factor)
    out = jax.block_until_ready(out)
    ref = _reference(x, weight, bias,
                     kernel_size=kernel_size, scale_factor=scale_factor)
    assert out.shape == (N, out_channels, scale_factor * H, scale_factor * W), out.shape
    assert jnp.allclose(out, ref, atol=1e-4, rtol=1e-4), \
        float(jnp.max(jnp.abs(out - ref)))

    # scale_factor == 1 branch of the module (stride-1, no output_padding).
    out1 = resize_conv2d(x, weight, bias, kernel_size=kernel_size, scale_factor=1)
    out1 = jax.block_until_ready(out1)
    ref1 = _reference(x, weight, bias, kernel_size=kernel_size, scale_factor=1)
    assert out1.shape == ref1.shape, (out1.shape, ref1.shape)
    assert jnp.allclose(out1, ref1, atol=1e-4, rtol=1e-4), \
        float(jnp.max(jnp.abs(out1 - ref1)))

    print("KERNEL_OK")
</pallas_src>

<mosaic_0001>
module attributes {stable_mosaic.version = 11 : i64} {
  func.func @_subpixel_matmul_kernel(%arg0: i32, %arg1: memref<16x256xf32, #tpu.memory_space<vmem>>, %arg2: memref<32x16xf32, #tpu.memory_space<vmem>>, %arg3: memref<32x1xf32, #tpu.memory_space<vmem>>, %arg4: memref<32x256xf32, #tpu.memory_space<vmem>>) attributes {dimension_semantics = [#tpu.dimension_semantics<parallel>], iteration_bounds = array<i64: 2>, scalar_prefetch = 0 : i64, scratch_operands = 0 : i64, tpu.core_type = #tpu.core_type<tc>, window_params = [{transform_indices = @transform_0, window_bounds = array<i64: 16, 256>}, {pipeline_mode = #tpu.pipeline_mode<synchronous>, transform_indices = @transform_1, window_bounds = array<i64: 32, 16>}, {pipeline_mode = #tpu.pipeline_mode<synchronous>, transform_indices = @transform_2, window_bounds = array<i64: 32, 1>}, {transform_indices = @transform_3, window_bounds = array<i64: 32, 256>}]} {
    %c0 = arith.constant 0 : index
    %c0_0 = arith.constant 0 : index
    %0 = vector.load %arg2[%c0, %c0_0] : memref<32x16xf32, #tpu.memory_space<vmem>>, vector<32x16xf32>
    %c0_1 = arith.constant 0 : index
    %c0_2 = arith.constant 0 : index
    %1 = vector.load %arg1[%c0_1, %c0_2] : memref<16x256xf32, #tpu.memory_space<vmem>>, vector<16x256xf32>
    %cst = arith.constant dense<0.000000e+00> : vector<32x256xf32>
    %2 = tpu.matmul %0, %1, %cst {dimension_numbers = #tpu.dot_dimension_numbers<[1], [0], [0], [1], [0, 0, 1, 1], [], []>} : vector<32x16xf32>, vector<16x256xf32>, vector<32x256xf32> -> vector<32x256xf32>
    %c0_3 = arith.constant 0 : index
    %c0_4 = arith.constant 0 : index
    %3 = vector.load %arg3[%c0_3, %c0_4] : memref<32x1xf32, #tpu.memory_space<vmem>>, vector<32x1xf32>
    %4 = vector.broadcast %3 : vector<32x1xf32> to vector<32x256xf32>
    %5 = arith.addf %2, %4 : vector<32x256xf32>
    %c0_5 = arith.constant 0 : index
    %c0_6 = arith.constant 0 : index
    %6 = vector.load %arg4[%c0_5, %c0_6] : memref<32x256xf32, #tpu.memory_space<vmem>>, vector<32x256xf32>
    tpu.vector_store %arg4[%c0_5, %c0_6], %5 {strides = array<i32>} : memref<32x256xf32, #tpu.memory_space<vmem>>, vector<32x256xf32>,
    return
  }
  func.func @transform_0(%arg0: i32) -> (i32, i32) {
    %c0_i32 = arith.constant 0 : i32
    %c0_i32_0 = arith.constant 0 : i32
    return %c0_i32, %arg0 : i32, i32
  }
  func.func @transform_1(%arg0: i32) -> (i32, i32) {
    %c0_i32 = arith.constant 0 : i32
    %c0_i32_0 = arith.constant 0 : i32
    %c0_i32_1 = arith.constant 0 : i32
    return %c0_i32, %c0_i32_0 : i32, i32
  }
  func.func @transform_2(%arg0: i32) -> (i32, i32) {
    %c0_i32 = arith.constant 0 : i32
    %c0_i32_0 = arith.constant 0 : i32
    %c0_i32_1 = arith.constant 0 : i32
    return %c0_i32, %c0_i32_0 : i32, i32
  }
  func.func @transform_3(%arg0: i32) -> (i32, i32) {
    %c0_i32 = arith.constant 0 : i32
    %c0_i32_0 = arith.constant 0 : i32
    return %c0_i32, %arg0 : i32, i32
  }
}

</mosaic_0001>

<llo_original>
// kernel: tpu_custom_call.1
$region0: #{tpu_custom_call.1}
  #allocation0 [shape = 'u32[]', space=smem, size = 0x4, offset = 0x4, fixed_abs, tag = 'smem constant byte address 0x4 - core index']
  #allocation1 [shape = 'u32[144,128]{1,0:T(1,128)}', space=vmem, size = 0x12000, scoped, tag = 'internal scratch']
  %s0 = inlined_call_operand.vmem [shape: f32[16,512], index: 0, kind: input, shape index: {}]
  %s1 = inlined_call_operand.vmem [shape: f32[32,16], index: 1, kind: input, shape index: {}]
  %s2 = inlined_call_operand.vmem [shape: f32[32,1], index: 2, kind: input, shape index: {}]
  %s3 = inlined_call_operand.hbm [shape: f32[32,512], index: 3, kind: output, shape index: {}]
  %s4 = sld [smem:[#allocation0]]
  $region68: #{tpu_custom_call.1} parent=0
    _
  %s6 = ssub.s32 1, %s4
  %s7 = scalar_select 0, %s6, %s4
  $region1: #{tpu_custom_call.1} parent=0
    #allocation2 [shape = 'u8[32768]{0}', space=vmem, size = 0x8000, scoped, tag = 'input window, operand 0']
    #allocation3 [shape = 'u8[65536]{0}', space=vmem, size = 0x10000, scoped, tag = 'output window, operand 0']
    #allocation4 [shape = 's32[2]{0}', space=sflag, size = 0x8, scoped, tag = 'scoped memory for tpu_custom_call.1']
    %8 = vsyncpa [#allocation4], 0
    %s9 = scalar_lea.sflag [#allocation4], 1
    %10 = vsyncpa %s9, 0
    loop: start=0, step=1, limit=4
    $region2: #{tpu_custom_call.1} parent=1 // loop_pre_header
      _
    $region3: #{tpu_custom_call.1} parent=1 // loop_header
      %s12 = sphi 0, %s16
      %p13 = scmp.ge.s32.totalorder %s12, 4
      %s22 = sphi 0, %s24
      %s25 = sphi 0, %s22
      %s26 = sphi 0, %s25
      %s42 = sphi 0, %s26
      %s46 = sphi 0, %s46
      %s48 = sphi 0, %s46
      %s49 = sphi 0, %s48
      %s63 = sphi 0, %s49
      %s67 = sphi 0, %s67
      %s69 = sphi 0, %s67
      %s70 = sphi 0, %s69
      %s84 = sphi 0, %s70
      %s90 = sphi 0, %s92
      %s93 = sphi 0, %s90
      %s94 = sphi 0, %s93
      %s110 = sphi 0, %s94
    $region4: #{tpu_custom_call.1} parent=1 // loop_header_branch
      %15 = sbr.rel (%p13) target = $region8
    $region5: #{tpu_custom_call.1} parent=1 // loop_body
      %s17 = ssub.s32 %s12, 1
      %s18 = ssub.s32 %s12, 2
      %s19 = sadd.s32 %s12, 1
      %s20 = ssub.s32 %s12, %s19
      %p21 = scmp.eq.s32.totalorder %s20, 0
      %s23 = sadd.s32 %s22, 1
      %s24 = scalar_select %p21, %s22, %s23
      %p27 = pneg %p21
      %p28 = scmp.eq.s32.totalorder %s12, 1
      %p29 = por %p27, %p28
      %p30 = scmp.ne.s32.totalorder %s22, %s25
      %p31 = scmp.eq.s32.totalorder %s12, 0
      %p32 = por %p30, %p31
      %p33 = scmp.ne.s32.totalorder %s22, %s25
      %p34 = scmp.eq.s32.totalorder %s17, 1
      %p35 = por %p33, %p34
      %p36 = scmp.ne.s32.totalorder %s25, %s26
      %p37 = scmp.eq.s32.totalorder %s17, 0
      %p38 = por %p36, %p37
      %p39 = scmp.ne.s32.totalorder %s25, %s26
      %p40 = scmp.eq.s32.totalorder %s18, 1
      %p41 = por %p39, %p40
      %p43 = scmp.ne.s32.totalorder %s26, %s42
      %p44 = scmp.eq.s32.totalorder %s18, 0
      %p45 = por %p43, %p44
      %s47 = sadd.s32 %s46, 1
      %p50 = scmp.eq.s32.totalorder %s12, 1
      %p51 = scmp.ne.s32.totalorder %s46, %s48
      %p52 = scmp.eq.s32.totalorder %s12, 0
      %p53 = por %p51, %p52
      %p54 = scmp.ne.s32.totalorder %s46, %s48
      %p55 = scmp.eq.s32.totalorder %s17, 1
      %p56 = por %p54, %p55
      %p57 = scmp.ne.s32.totalorder %s48, %s49
      %p58 = scmp.eq.s32.totalorder %s17, 0
      %p59 = por %p57, %p58
      %p60 = scmp.ne.s32.totalorder %s48, %s49
      %p61 = scmp.eq.s32.totalorder %s18, 1
      %p62 = por %p60, %p61
      %p64 = scmp.ne.s32.totalorder %s49, %s63
      %p65 = scmp.eq.s32.totalorder %s18, 0
      %p66 = por %p64, %p65
      %s68 = sadd.s32 %s67, 1
      %p71 = scmp.eq.s32.totalorder %s12, 1
      %p72 = scmp.ne.s32.totalorder %s67, %s69
      %p73 = scmp.eq.s32.totalorder %s12, 0
      %p74 = por %p72, %p73
      %p75 = scmp.ne.s32.totalorder %s67, %s69
      %p76 = scmp.eq.s32.totalorder %s17, 1
      %p77 = por %p75, %p76
      %p78 = scmp.ne.s32.totalorder %s69, %s70
      %p79 = scmp.eq.s32.totalorder %s17, 0
      %p80 = por %p78, %p79
      %p81 = scmp.ne.s32.totalorder %s69, %s70
      %p82 = scmp.eq.s32.totalorder %s18, 1
      %p83 = por %p81, %p82
      %p85 = scmp.ne.s32.totalorder %s70, %s84
      %p86 = scmp.eq.s32.totalorder %s18, 0
      %p87 = por %p85, %p86
      %s88 = ssub.s32 %s12, %s19
      %p89 = scmp.eq.s32.totalorder %s88, 0
      %s91 = sadd.s32 %s90, 1
      %s92 = scalar_select %p89, %s90, %s91
      %p95 = pneg %p89
      %p96 = scmp.eq.s32.totalorder %s12, 1
      %p97 = por %p95, %p96
      %p98 = scmp.ne.s32.totalorder %s90, %s93
      %p99 = scmp.eq.s32.totalorder %s12, 0
      %p100 = por %p98, %p99
      %p101 = scmp.ne.s32.totalorder %s90, %s93
      %p102 = scmp.eq.s32.totalorder %s17, 1
      %p103 = por %p101, %p102
      %p104 = scmp.ne.s32.totalorder %s93, %s94
      %p105 = scmp.eq.s32.totalorder %s17, 0
      %p106 = por %p104, %p105
      %p107 = scmp.ne.s32.totalorder %s93, %s94
      %p108 = scmp.eq.s32.totalorder %s18, 1
      %p109 = por %p107, %p108
      %p111 = scmp.ne.s32.totalorder %s94, %s110
      %p112 = scmp.eq.s32.totalorder %s18, 0
      %p113 = por %p111, %p112
      %p114 = scmp.le.s32.totalorder 1, %s12
      %p115 = scmp.lt.s32.totalorder %s12, 3
      %p116 = pnand %p114, %p115
      %p117 = pneg %p116
      // Predicated region
      $region9: #{tpu_custom_call.1} parent=5 // pred_check
        _
      $region10: #{tpu_custom_call.1} parent=5 // pred_check_branch
        %119 = sbr.rel (%p116) target = $region12
      $region11: #{tpu_custom_call.1} parent=5 // pred_region
        %s120 = ssub.s32 %s12, 1
        // Predicated region
        $region13: #{tpu_custom_call.1} parent=11 // pred_check
          %p121 = pneg %p59
        $region14: #{tpu_custom_call.1} parent=11 // pred_check_branch
          %123 = sbr.rel (%p121) target = $region16
        $region15: #{tpu_custom_call.1} parent=11 // pred_region
          _
        $region16: #{tpu_custom_call.1} parent=11 // pred_fallthru
          _
        // Predicated region
        $region17: #{tpu_custom_call.1} parent=11 // pred_check
          %p124 = pneg %p80
        $region18: #{tpu_custom_call.1} parent=11 // pred_check_branch
          %126 = sbr.rel (%p124) target = $region20
        $region19: #{tpu_custom_call.1} parent=11 // pred_region
          _
        $region20: #{tpu_custom_call.1} parent=11 // pred_fallthru
          _
      $region12: #{tpu_custom_call.1} parent=5 // pred_fallthru
        _
      %p127 = scmp.lt.s32.totalorder %s12, 2
      // Predicated region
      $region21: #{tpu_custom_call.1} parent=5 // pred_check
        %p128 = pneg %p127
      $region22: #{tpu_custom_call.1} parent=5 // pred_check_branch
        %130 = sbr.rel (%p128) target = $region24
      $region23: #{tpu_custom_call.1} parent=5 // pred_region
        // Predicated region
        $region25: #{tpu_custom_call.1} parent=23 // pred_check
          %p131 = pneg %p32
        $region26: #{tpu_custom_call.1} parent=23 // pred_check_branch
          %133 = sbr.rel (%p131) target = $region28
        $region27: #{tpu_custom_call.1} parent=23 // pred_region
          %s134 = sand.u32 %s22, 1
          %s135 = sand.u32 %s22, 1
          %s136 = smul.addr %s135, 32
          %s137 = scalar_lea.vmem [#allocation2], %s136
          %s138 = smul.u32 2, %s12
          %s139 = smul.addr %s138, 8
          %s140 = scalar_lea.vmem %s0, %s139
          // Predicated region
          $region29: #{tpu_custom_call.1} parent=27 // pred_check
            _
          $region30: #{tpu_custom_call.1} parent=27 // pred_check_branch
            %142 = sbr.rel (0) target = $region32
          $region31: #{tpu_custom_call.1} parent=27 // pred_region
            // Predicated region
            $region33: #{tpu_custom_call.1} parent=31 // pred_check
              _
            $region34: #{tpu_custom_call.1} parent=31 // pred_check_branch
              %144 = sbr.rel (0) target = $region36
            $region35: #{tpu_custom_call.1} parent=31 // pred_region
              loop: start=0, step=1, limit=1
              $region37: #{tpu_custom_call.1} parent=35 // loop_pre_header
                _
              $region38: #{tpu_custom_call.1} parent=35 // loop_header
                %s146 = sphi 0, %s150
                %p147 = scmp.ge.s32.totalorder %s146, 1
                %s151 = sphi %s140, %s140
                %s152 = sphi %s137, %s137
              $region39: #{tpu_custom_call.1} parent=35 // loop_header_branch
                %149 = sbr.rel (%p147) target = $region43
              $region40: #{tpu_custom_call.1} parent=35 // loop_body
                %v153 = vld [vmem:[%s151] sm:$0xff]
                %154 = vst [vmem:[%s152] sm:$0xff] %v153
                %v155 = vld [vmem:[%s151 + $0x8] sm:$0xff]
                %156 = vst [vmem:[%s152 + $0x8] sm:$0xff] %v155
                %v157 = vld [vmem:[%s151 + $0x20] sm:$0xff]
                %158 = vst [vmem:[%s152 + $0x10] sm:$0xff] %v157
                %v159 = vld [vmem:[%s151 + $0x28] sm:$0xff]
                %160 = vst [vmem:[%s152 + $0x18] sm:$0xff] %v159
              $region41: #{tpu_custom_call.1} parent=35 // loop_footer
                %s150 = sadd.s32 1, %s146
              $region42: #{tpu_custom_call.1} parent=35 // loop_footer_branch
                %145 = sbr.rel target = $region38
              $region43: #{tpu_custom_call.1} parent=35 // loop_exit
                _
            $region36: #{tpu_custom_call.1} parent=31 // pred_fallthru
              _
            // Predicated region
            $region44: #{tpu_custom_call.1} parent=31 // pred_check
              _
            $region45: #{tpu_custom_call.1} parent=31 // pred_check_branch
              %162 = sbr.rel target = $region47
            $region46: #{tpu_custom_call.1} parent=31 // pred_region
              _
            $region47: #{tpu_custom_call.1} parent=31 // pred_fallthru
              _
          $region32: #{tpu_custom_call.1} parent=27 // pred_fallthru
            _
          %163 = vnop
        $region28: #{tpu_custom_call.1} parent=23 // pred_fallthru
          _
      $region24: #{tpu_custom_call.1} parent=5 // pred_fallthru
        _
      %p164 = scmp.le.s32.totalorder 1, %s12
      %p165 = scmp.lt.s32.totalorder %s12, 3
      %p166 = pnand %p164, %p165
      %p167 = pneg %p166
      // Predicated region
      $region48: #{tpu_custom_call.1} parent=5 // pred_check
        _
      $region49: #{tpu_custom_call.1} parent=5 // pred_check_branch
        %169 = sbr.rel (%p166) target = $region51
      $region50: #{tpu_custom_call.1} parent=5 // pred_region
        %s170 = ssub.s32 %s12, 1
        %s171 = sand.u32 %s25, 1
        %s172 = sand.u32 %s25, 1
        %s173 = smul.addr %s172, 32
        %s174 = scalar_lea.vmem [#allocation2], %s173
        // Predicated region
        $region52: #{tpu_custom_call.1} parent=50 // pred_check
          %p175 = pneg %p38
        $region53: #{tpu_custom_call.1} parent=50 // pred_check_branch
          %177 = sbr.rel (%p175) target = $region55
        $region54: #{tpu_custom_call.1} parent=50 // pred_region
          _
        $region55: #{tpu_custom_call.1} parent=50 // pred_fallthru
          _
        %s178 = sand.u32 %s25, 1
        %s179 = sand.u32 %s25, 1
        %s180 = smul.addr %s179, 32
        %s181 = scalar_lea.vmem [#allocation2], %s180
        %p182 = pneg %p38
        %p183 = pneg %p35
        %p184 = pneg %p59
        %p185 = pneg %p56
        %p186 = pneg %p80
        %p187 = pneg %p77
        %p188 = pneg %p106
        %p189 = pneg %p103
        %s190 = sand.u32 %s93, 1
        %s191 = scalar_lea.sflag [#allocation4], %s190
        %s192 = sand.u32 %s93, 1
        %s193 = smul.addr %s192, 64
        %s194 = scalar_lea.vmem [#allocation3], %s193
        %s195 = smul.u32 2, %s17
        %s196 = smul.u32 2, %s17
        %v197 = vld [vmem:[%s1] sm:$0xff]
        %v198 = vld [vmem:[%s1 + $0x8] sm:$0xff]
        %v199 = vld [vmem:[%s1 + $0x10] sm:$0xff]
        %v200 = vld [vmem:[%s1 + $0x18] sm:$0xff]
        %v201 = vld [vmem:[%s174] sm:$0xff]
        %v202 = vld [vmem:[%s174 + $0x8] sm:$0xff]
        %v203 = vld [vmem:[%s174 + $0x10] sm:$0xff]
        %v204 = vld [vmem:[%s174 + $0x18] sm:$0xff]
        %v205 = vld [vmem:[%s2] sm:$0xff]
        %v206 = vld [vmem:[%s2 + $0x8] sm:$0xff]
        %v207 = vld [vmem:[%s2 + $0x10] sm:$0xff]
        %v208 = vld [vmem:[%s2 + $0x18] sm:$0xff]
        %210 = vset.pattern.permute.xlu0 0
        %211 = vperm.xlu0 %210, %v205
        %v212 = vpop.permute.xlu0 %211
        %215 = vset.pattern.permute.xlu0 0
        %216 = vperm.xlu0 %215, %v206
        %v217 = vpop.permute.xlu0 %216
        %220 = vset.pattern.permute.xlu0 0
        %221 = vperm.xlu0 %220, %v207
        %v222 = vpop.permute.xlu0 %221
        %225 = vset.pattern.permute.xlu0 0
        %226 = vperm.xlu0 %225, %v208
        %v227 = vpop.permute.xlu0 %226
        %vm229 = vcmask 130048
        %v231 = vsel %vm229, %v197, 0
        %v234 = vsel %vm229, %v198, 0
        %v237 = vsel %vm229, %v199, 0
        %v240 = vsel %vm229, %v200, 0
        %242 = vmatprep.subr.mxu0 0.0
        %243 = vmatpush1.msra.mxu0 0.0
        %244 = vmatprep.subr.mxu0 0.0
        %245 = vmatpush1.msra.mxu0 0.0
        %246 = vmatprep.subr.mxu0 0.0
        %247 = vmatpush1.msra.mxu0 0.0
        %248 = vmatprep.subr.mxu0 0.0
        %249 = vmatpush1.msra.mxu0 0.0
        %250 = vmatprep.subr.mxu0 0.0
        %251 = vmatpush1.msra.mxu0 0.0
        %252 = vmatprep.subr.mxu0 0.0
        %253 = vmatpush1.msra.mxu0 0.0
        %254 = vmatprep.subr.mxu0 0.0
        %255 = vmatpush1.msra.mxu0 0.0
        %256 = vmatprep.subr.mxu0 0.0
        %257 = vmatpush1.msra.mxu0 0.0
        %258 = vmatprep.subr.mxu0 0.0
        %259 = vmatpush1.msra.mxu0 0.0
        %260 = vmatprep.subr.mxu0 0.0
        %261 = vmatpush1.msra.mxu0 0.0
        %262 = vmatprep.subr.mxu0 0.0
        %263 = vmatpush1.msra.mxu0 0.0
        %264 = vmatprep.subr.mxu0 0.0
        %265 = vmatpush1.msra.mxu0 0.0
        %266 = vmatprep.subr.mxu0 0.0
        %267 = vmatpush1.msra.mxu0 0.0
        %268 = vmatprep.subr.mxu0 0.0
        %269 = vmatpush1.msra.mxu0 0.0
        %270 = vmatprep.subr.mxu0 %v204
        %271 = vmatpush1.msra.mxu0 %v203
        %272 = vmatprep.subr.mxu0 %v202
        %273 = vmatpush1.msra.mxu0 %v201
        %274 = vmatprep.subr.mxu0 0.0
        %275 = vmatpush2.msra.mxu0 0.0
        %276 = vmatprep.subr.mxu0 0.0
        %277 = vmatpush2.msra.mxu0 0.0
        %278 = vmatprep.subr.mxu0 0.0
        %279 = vmatpush2.msra.mxu0 0.0
        %280 = vmatprep.subr.mxu0 0.0
        %281 = vmatpush2.msra.mxu0 0.0
        %282 = vmatprep.subr.mxu0 0.0
        %283 = vmatpush2.msra.mxu0 0.0
        %284 = vmatprep.subr.mxu0 0.0
        %285 = vmatpush2.msra.mxu0 0.0
        %286 = vmatprep.subr.mxu0 0.0
        %287 = vmatpush2.msra.mxu0 0.0
        %288 = vmatprep.subr.mxu0 0.0
        %289 = vmatpush2.msra.mxu0 0.0
        %290 = vmatprep.subr.mxu0 0.0
        %291 = vmatpush2.msra.mxu0 0.0
        %292 = vmatprep.subr.mxu0 0.0
        %293 = vmatpush2.msra.mxu0 0.0
        %294 = vmatprep.subr.mxu0 0.0
        %295 = vmatpush2.msra.mxu0 0.0
        %296 = vmatprep.subr.mxu0 0.0
        %297 = vmatpush2.msra.mxu0 0.0
        %298 = vmatprep.subr.mxu0 0.0
        %299 = vmatpush2.msra.mxu0 0.0
        %300 = vmatprep.subr.mxu0 0.0
        %301 = vmatpush2.msra.mxu0 0.0
        %302 = vmatprep.subr.mxu0 0.0
        %303 = vmatpush2.msra.mxu0 0.0
        %304 = vmatprep.subr.mxu0 0.0
        %305 = vmatpush2.msra.mxu0 0.0
        %306 = vmatprep.mubr.f32.mxu0 0.0
        %307 = vmatmul.mubr.f32.gmra.mxu0 %v231
        %v308 = vpop.f32.mrf.mxu0
        %v309 = vadd.f32 %v212, %v308
        %v310 = vpop.f32.mrf.mxu0
        %v311 = vadd.f32 %v212, %v310
        %312 = vmatprep.mubr.f32.mxu0 0.0
        %313 = vmatmul.mubr.f32.gmra.mxu0 %v234
        %v314 = vpop.f32.mrf.mxu0
        %v315 = vadd.f32 %v217, %v314
        %v316 = vpop.f32.mrf.mxu0
        %v317 = vadd.f32 %v217, %v316
        %318 = vmatprep.mubr.f32.mxu0 0.0
        %319 = vmatmul.mubr.f32.gmra.mxu0 %v237
        %v320 = vpop.f32.mrf.mxu0
        %v321 = vadd.f32 %v222, %v320
        %v322 = vpop.f32.mrf.mxu0
        %v323 = vadd.f32 %v222, %v322
        %324 = vmatprep.mubr.f32.mxu0 0.0
        %325 = vmatmul.mubr.f32.gmra.mxu0 %v240
        %v326 = vpop.f32.mrf.mxu0
        %v327 = vadd.f32 %v227, %v326
        %v328 = vpop.f32.mrf.mxu0
        %v329 = vadd.f32 %v227, %v328
        %330 = vdwg.mxu0
        %331 = vst [vmem:[%s194] sm:$0xff] %v309
        %332 = vst [vmem:[%s194 + $0x8] sm:$0xff] %v311
        %333 = vst [vmem:[%s194 + $0x10] sm:$0xff] %v315
        %334 = vst [vmem:[%s194 + $0x18] sm:$0xff] %v317
        %335 = vst [vmem:[%s194 + $0x20] sm:$0xff] %v321
        %336 = vst [vmem:[%s194 + $0x28] sm:$0xff] %v323
        %337 = vst [vmem:[%s194 + $0x30] sm:$0xff] %v327
        %338 = vst [vmem:[%s194 + $0x38] sm:$0xff] %v329
        %s339 = sand.u32 %s93, 1
        %s340 = scalar_lea.sflag [#allocation4], %s339
        %s341 = sand.u32 %s93, 1
        %s342 = smul.addr %s341, 64
        %s343 = scalar_lea.vmem [#allocation3], %s342
        // Predicated region
        $region56: #{tpu_custom_call.1} parent=50 // pred_check
          %p344 = pneg %p103
        $region57: #{tpu_custom_call.1} parent=50 // pred_check_branch
          %346 = sbr.rel (%p344) target = $region59
        $region58: #{tpu_custom_call.1} parent=50 // pred_region
          %s347 = smul.u32 2, %s17
          %s349 = ssub.s32 1024, 1024
          %350 = vsyncadd %s340, %s349
          %s351 = smul.addr %s347, 128
          %s352 = scalar_lea.hbm %s3, %s351
          %s353 = sshll.u32 %s343, 4
          %s354 = int_to_ptr.vmem [resolvable:$true] %s353
          %359 = dma.vmem_to_hbm [thread:$0]  %s354, 1024, %s352, %s340, 256, 512, 16
        $region59: #{tpu_custom_call.1} parent=50 // pred_fallthru
          _
      $region51: #{tpu_custom_call.1} parent=5 // pred_fallthru
        _
      %p360 = scmp.le.s32.totalorder 2, %s12
      // Predicated region
      $region60: #{tpu_custom_call.1} parent=5 // pred_check
        %p361 = pneg %p360
      $region61: #{tpu_custom_call.1} parent=5 // pred_check_branch
        %363 = sbr.rel (%p361) target = $region63
      $region62: #{tpu_custom_call.1} parent=5 // pred_region
        %s364 = ssub.s32 %s12, 2
        // Predicated region
        $region64: #{tpu_custom_call.1} parent=62 // pred_check
          %p365 = pneg %p109
        $region65: #{tpu_custom_call.1} parent=62 // pred_check_branch
          %367 = sbr.rel (%p365) target = $region67
        $region66: #{tpu_custom_call.1} parent=62 // pred_region
          %s368 = sand.u32 %s94, 1
          %s369 = scalar_lea.sflag [#allocation4], %s368
          %s370 = sand.u32 %s94, 1
          %s371 = smul.addr %s370, 64
          %s372 = scalar_lea.vmem [#allocation3], %s371
          %373 = dma.done %s369, 1024
        $region67: #{tpu_custom_call.1} parent=62 // pred_fallthru
          _
      $region63: #{tpu_custom_call.1} parent=5 // pred_fallthru
        _
    $region6: #{tpu_custom_call.1} parent=1 // loop_footer
      %s16 = sadd.s32 1, %s12
    $region7: #{tpu_custom_call.1} parent=1 // loop_footer_branch
      %11 = sbr.rel target = $region3
    $region8: #{tpu_custom_call.1} parent=1 // loop_exit
      _
    %374 = vsyncpa [#allocation4], 1
    %s375 = scalar_lea.sflag [#allocation4], 1
    %376 = vsyncpa %s375, 1

</llo_original>
